<compile_context>
chip_gen: v6e
topology: v6e:2x2x1
jax: 0.10.0
libtpu: 0.0.40
codegen_flags: <defaults>
</compile_context>

<pallas_src>
import functools

import jax
import jax.numpy as jnp
from jax.experimental import pallas as pl
from jax.experimental.pallas import tpu as pltpu


# ---------------------------------------------------------------------------
# Kernel
# ---------------------------------------------------------------------------
def generator_kernel(x_ref, w1_ref, b1_ref, w2_ref, b2_ref, o_ref,
                     *, bf16_epilogue):
    # Cast activations to bf16 in-kernel (saves a separate XLA cast pass).
    x_b = x_ref[...].astype(jnp.bfloat16)
    # Linear 1 on the MXU: bf16 x bf16 -> f32 accumulation.
    h = jnp.dot(x_b, w1_ref[...], preferred_element_type=jnp.float32)
    h = h + b1_ref[...]                       # broadcast [1, H] over batch (f32)
    # LeakyReLU(0.1): single VPU max.
    h = jnp.maximum(h, 0.1 * h)
    # Linear 2 on the MXU: recast activations to bf16, accumulate in f32.
    y = jnp.dot(h.astype(jnp.bfloat16), w2_ref[...],
                preferred_element_type=jnp.float32)
    y = y + b2_ref[...]                       # broadcast [1, Dp] over batch (f32)
    if bf16_epilogue:
        # v6e/v7x: bf16 EUP tanh (2x throughput, half the live vregs).
        o_ref[...] = jnp.tanh(y.astype(jnp.bfloat16)).astype(o_ref.dtype)
    else:
        # v5e has no bf16 EUP/VPU path -> keep tanh in f32.
        o_ref[...] = jnp.tanh(y).astype(o_ref.dtype)


# ---------------------------------------------------------------------------
# Helpers
# ---------------------------------------------------------------------------
def _round_up(a, m):
    return ((a + m - 1) // m) * m


def _device_kind():
    try:
        return jax.devices()[0].device_kind.lower()
    except Exception:  # pragma: no cover - defensive
        return ""


def _num_tensorcores(kind):
    # v7x packs 2 TensorCores per chip; v5e/v6e have 1.
    return 2 if "v7" in kind else 1


def _use_bf16_epilogue(kind):
    # bf16 VPU/EUP exists on v6e and v7x; v5e (and unknown) -> f32 epilogue.
    return ("v6" in kind) or ("v7" in kind)


def prepare_params(w1, b1, w2, b2):
    """One-time parameter prep (do NOT call per forward):

    * pads the output feature dim of w2/b2 up to a multiple of 128 for
      lane-dense stores,
    * casts weights to bf16 (native MXU path, half the HBM/DMA bytes),
    * reshapes biases to [1, out_features] f32 for in-kernel broadcast.

    Returns (w1_b, b1_2d, w2_b, b2_2d, img_dim).
    """
    z_dim, hidden = w1.shape
    img_dim = w2.shape[1]
    d_pad = _round_up(img_dim, 128)
    if d_pad != img_dim:
        w2 = jnp.pad(w2, ((0, 0), (0, d_pad - img_dim)))
        b2 = jnp.pad(b2, ((0, d_pad - img_dim),))
    w1_b = w1.astype(jnp.bfloat16)
    w2_b = w2.astype(jnp.bfloat16)
    b1_2d = b1.reshape(1, hidden).astype(jnp.float32)
    b2_2d = b2.reshape(1, d_pad).astype(jnp.float32)
    return w1_b, b1_2d, w2_b, b2_2d, img_dim


# ---------------------------------------------------------------------------
# Forward wrapper
# ---------------------------------------------------------------------------
def generator_forward(x, params, *, unpad=True, max_tm=1024):
    """x: [B, z_dim] float32, params from prepare_params().

    Returns bf16 activations: [B, img_dim] if unpad else [Bp, Dp] (padded
    rows/cols contain tanh(bias) / 0 respectively and must be ignored).
    """
    w1_b, b1_2d, w2_b, b2_2d, img_dim = params
    B, Z = x.shape
    H = w1_b.shape[1]
    Dp = w2_b.shape[1]

    kind = _device_kind()
    n_cores = _num_tensorcores(kind)
    bf16_epilogue = _use_bf16_epilogue(kind)

    # Batch tiling:
    #  * 1-TC chips (v5e/v6e): one block covering the whole (16-aligned) batch
    #    -> no per-grid-step overhead.
    #  * 2-TC chips (v7x): even 2-way split so ("parallel",) balances cores.
    # TM is a multiple of 16 for clean bf16 sublane packing; capped so the
    # double-buffered x/out tiles stay tiny relative to VMEM.
    if n_cores >= 2:
        TM = _round_up(pl.cdiv(B, 2), 16)
    else:
        TM = _round_up(B, 16)
    TM = max(16, min(TM, max_tm))
    Bp = _round_up(B, TM)
    if Bp != B:
        x = jnp.pad(x, ((0, Bp - B), (0, 0)))

    grid = (Bp // TM,)
    flops = 2 * Bp * (Z * H + H * Dp)
    bytes_accessed = (Bp * Z * 4            # x (f32 in)
                      + w1_b.size * 2 + w2_b.size * 2    # bf16 weights
                      + b1_2d.size * 4 + b2_2d.size * 4  # f32 biases
                      + Bp * Dp * 2)        # bf16 output

    kernel = functools.partial(generator_kernel, bf16_epilogue=bf16_epilogue)

    out_p = pl.pallas_call(
        kernel,
        out_shape=jax.ShapeDtypeStruct((Bp, Dp), jnp.bfloat16),
        grid=grid,
        in_specs=[
            pl.BlockSpec((TM, Z), lambda i: (i, 0)),    # batch-tiled activations
            pl.BlockSpec((Z, H), lambda i: (0, 0)),     # w1 resident across steps
            pl.BlockSpec((1, H), lambda i: (0, 0)),     # b1 resident
            pl.BlockSpec((H, Dp), lambda i: (0, 0)),    # w2 resident
            pl.BlockSpec((1, Dp), lambda i: (0, 0)),    # b2 resident
        ],
        out_specs=pl.BlockSpec((TM, Dp), lambda i: (i, 0)),
        compiler_params=pltpu.CompilerParams(
            dimension_semantics=("parallel",)),          # v7x: 2-way core split
        cost_estimate=pl.CostEstimate(
            flops=flops,
            transcendentals=Bp * Dp,
            bytes_accessed=bytes_accessed),
    )(x, w1_b, b1_2d, w2_b, b2_2d)

    if not unpad:
        return out_p
    # Strip batch / lane padding (skip when consumers accept the padded slab).
    return out_p[:B, :img_dim]


# ---------------------------------------------------------------------------
# Init (mimics PyTorch default Linear init: U(+/- 1/sqrt(fan_in)))
# ---------------------------------------------------------------------------
def init_params(key, z_dim, hidden, img_dim):
    k1, k2, k3, k4 = jax.random.split(key, 4)
    lim1 = 1.0 / (z_dim ** 0.5)
    lim2 = 1.0 / (hidden ** 0.5)
    w1 = jax.random.uniform(k1, (z_dim, hidden), jnp.float32, -lim1, lim1)
    b1 = jax.random.uniform(k2, (hidden,), jnp.float32, -lim1, lim1)
    w2 = jax.random.uniform(k3, (hidden, img_dim), jnp.float32, -lim2, lim2)
    b2 = jax.random.uniform(k4, (img_dim,), jnp.float32, -lim2, lim2)
    return w1, b1, w2, b2


if __name__ == "__main__":
    z_dim = 64          # fixed by the module
    hidden = 256        # fixed by the module definition
    img_dim = 784       # e.g. 28*28 MNIST images
    batch = 64          # small: exercises single-block (or 2x32 on v7x)

    key = jax.random.PRNGKey(0)
    k_x, k_p = jax.random.split(key)
    x = jax.random.normal(k_x, (batch, z_dim), jnp.float32)
    w1, b1, w2, b2 = init_params(k_p, z_dim, hidden, img_dim)

    # One-time parameter prep (pad + bf16 cast), outside the hot path.
    params = prepare_params(w1, b1, w2, b2)

    out = generator_forward(x, params)
    out = jax.block_until_ready(out)

    # Reference in plain JAX (f32) to sanity-check the kernel.
    h_ref = x @ w1 + b1
    h_ref = jnp.where(h_ref > 0, h_ref, 0.1 * h_ref)
    ref = jnp.tanh(h_ref @ w2 + b2)

    assert out.shape == (batch, img_dim)
    assert out.dtype == jnp.bfloat16
    # bf16 matmul inputs + bf16 output (f32 accumulation) -> loose tolerance.
    err = float(jnp.max(jnp.abs(out.astype(jnp.float32) - ref)))
    assert err < 3e-2, err

    # Also check the small-batch (16-row padded block) path.
    out_small = jax.block_until_ready(generator_forward(x[:8], params))
    assert out_small.shape == (8, img_dim)
    err_s = float(jnp.max(jnp.abs(out_small.astype(jnp.float32) - ref[:8])))
    assert err_s < 3e-2, err_s

    print("KERNEL_OK")
</pallas_src>

<mosaic_0001>
module attributes {stable_mosaic.version = 11 : i64} {
  func.func @generator_kernel(%arg0: i32, %arg1: memref<64x64xf32, #tpu.memory_space<vmem>>, %arg2: memref<64x256xbf16, #tpu.memory_space<vmem>>, %arg3: memref<1x256xf32, #tpu.memory_space<vmem>>, %arg4: memref<256x896xbf16, #tpu.memory_space<vmem>>, %arg5: memref<1x896xf32, #tpu.memory_space<vmem>>, %arg6: memref<64x896xbf16, #tpu.memory_space<vmem>>) attributes {dimension_semantics = [#tpu.dimension_semantics<parallel>], iteration_bounds = array<i64: 1>, scalar_prefetch = 0 : i64, scratch_operands = 0 : i64, tpu.core_type = #tpu.core_type<tc>, window_params = [{transform_indices = @transform_0, window_bounds = array<i64: 64, 64>}, {pipeline_mode = #tpu.pipeline_mode<synchronous>, transform_indices = @transform_1, window_bounds = array<i64: 64, 256>}, {pipeline_mode = #tpu.pipeline_mode<synchronous>, transform_indices = @transform_2, window_bounds = array<i64: 1, 256>}, {pipeline_mode = #tpu.pipeline_mode<synchronous>, transform_indices = @transform_3, window_bounds = array<i64: 256, 896>}, {pipeline_mode = #tpu.pipeline_mode<synchronous>, transform_indices = @transform_4, window_bounds = array<i64: 1, 896>}, {transform_indices = @transform_5, window_bounds = array<i64: 64, 896>}]} {
    %c0 = arith.constant 0 : index
    %c0_0 = arith.constant 0 : index
    %0 = vector.load %arg1[%c0, %c0_0] : memref<64x64xf32, #tpu.memory_space<vmem>>, vector<64x64xf32>
    %1 = arith.truncf %0 : vector<64x64xf32> to vector<64x64xbf16>
    %c0_1 = arith.constant 0 : index
    %c0_2 = arith.constant 0 : index
    %2 = vector.load %arg2[%c0_1, %c0_2] : memref<64x256xbf16, #tpu.memory_space<vmem>>, vector<64x256xbf16>
    %cst = arith.constant dense<0.000000e+00> : vector<64x256xf32>
    %3 = tpu.matmul %1, %2, %cst {dimension_numbers = #tpu.dot_dimension_numbers<[1], [0], [0], [1], [0, 0, 1, 1], [], []>} : vector<64x64xbf16>, vector<64x256xbf16>, vector<64x256xf32> -> vector<64x256xf32>
    %c0_3 = arith.constant 0 : index
    %c0_4 = arith.constant 0 : index
    %4 = vector.load %arg3[%c0_3, %c0_4] : memref<1x256xf32, #tpu.memory_space<vmem>>, vector<1x256xf32>
    %5 = vector.broadcast %4 : vector<1x256xf32> to vector<64x256xf32>
    %6 = arith.addf %3, %5 : vector<64x256xf32>
    %cst_5 = arith.constant 1.000000e-01 : f32
    %7 = vector.broadcast %cst_5 : f32 to vector<64x256xf32>
    %8 = arith.mulf %7, %6 : vector<64x256xf32>
    %9 = arith.maximumf %6, %8 : vector<64x256xf32>
    %10 = arith.truncf %9 : vector<64x256xf32> to vector<64x256xbf16>
    %c0_6 = arith.constant 0 : index
    %c0_7 = arith.constant 0 : index
    %11 = vector.load %arg4[%c0_6, %c0_7] : memref<256x896xbf16, #tpu.memory_space<vmem>>, vector<256x896xbf16>
    %cst_8 = arith.constant dense<0.000000e+00> : vector<64x896xf32>
    %12 = tpu.matmul %10, %11, %cst_8 {dimension_numbers = #tpu.dot_dimension_numbers<[1], [0], [0], [1], [0, 0, 1, 1], [], []>} : vector<64x256xbf16>, vector<256x896xbf16>, vector<64x896xf32> -> vector<64x896xf32>
    %c0_9 = arith.constant 0 : index
    %c0_10 = arith.constant 0 : index
    %13 = vector.load %arg5[%c0_9, %c0_10] : memref<1x896xf32, #tpu.memory_space<vmem>>, vector<1x896xf32>
    %14 = vector.broadcast %13 : vector<1x896xf32> to vector<64x896xf32>
    %15 = arith.addf %12, %14 : vector<64x896xf32>
    %16 = math.tanh %15 : vector<64x896xf32>
    %17 = arith.truncf %16 : vector<64x896xf32> to vector<64x896xbf16>
    %c0_11 = arith.constant 0 : index
    %c0_12 = arith.constant 0 : index
    %18 = vector.load %arg6[%c0_11, %c0_12] : memref<64x896xbf16, #tpu.memory_space<vmem>>, vector<64x896xbf16>
    tpu.vector_store %arg6[%c0_11, %c0_12], %17 {strides = array<i32>} : memref<64x896xbf16, #tpu.memory_space<vmem>>, vector<64x896xbf16>,
    return
  }
  func.func @transform_0(%arg0: i32) -> (i32, i32) {
    %c0_i32 = arith.constant 0 : i32
    %c0_i32_0 = arith.constant 0 : i32
    return %arg0, %c0_i32 : i32, i32
  }
  func.func @transform_1(%arg0: i32) -> (i32, i32) {
    %c0_i32 = arith.constant 0 : i32
    %c0_i32_0 = arith.constant 0 : i32
    %c0_i32_1 = arith.constant 0 : i32
    return %c0_i32, %c0_i32_0 : i32, i32
  }
  func.func @transform_2(%arg0: i32) -> (i32, i32) {
    %c0_i32 = arith.constant 0 : i32
    %c0_i32_0 = arith.constant 0 : i32
    %c0_i32_1 = arith.constant 0 : i32
    return %c0_i32, %c0_i32_0 : i32, i32
  }
  func.func @transform_3(%arg0: i32) -> (i32, i32) {
    %c0_i32 = arith.constant 0 : i32
    %c0_i32_0 = arith.constant 0 : i32
    %c0_i32_1 = arith.constant 0 : i32
    return %c0_i32, %c0_i32_0 : i32, i32
  }
  func.func @transform_4(%arg0: i32) -> (i32, i32) {
    %c0_i32 = arith.constant 0 : i32
    %c0_i32_0 = arith.constant 0 : i32
    %c0_i32_1 = arith.constant 0 : i32
    return %c0_i32, %c0_i32_0 : i32, i32
  }
  func.func @transform_5(%arg0: i32) -> (i32, i32) {
    %c0_i32 = arith.constant 0 : i32
    %c0_i32_0 = arith.constant 0 : i32
    return %arg0, %c0_i32 : i32, i32
  }
}

</mosaic_0001>

<llo_original>
// kernel: tpu_custom_call.1
$region0: #{tpu_custom_call.1}
  #allocation0 [shape = 'u32[]', space=smem, size = 0x4, offset = 0x4, fixed_abs, tag = 'smem constant byte address 0x4 - core index']
  #allocation1 [shape = 'u32[144,128]{1,0:T(1,128)}', space=vmem, size = 0x12000, scoped, tag = 'internal scratch']
  %s0 = inlined_call_operand.hbm [shape: f32[64,64], index: 0, kind: input, shape index: {}]
  %s1 = inlined_call_operand.hbm [shape: bf16[64,256], index: 1, kind: input, shape index: {}]
  %s2 = inlined_call_operand.hbm [shape: f32[1,256], index: 2, kind: input, shape index: {}]
  %s3 = inlined_call_operand.hbm [shape: bf16[256,896], index: 3, kind: input, shape index: {}]
  %s4 = inlined_call_operand.vmem [shape: f32[1,896], index: 4, kind: input, shape index: {}]
  %s5 = inlined_call_operand.hbm [shape: bf16[64,896], index: 5, kind: output, shape index: {}]
  %s6 = sld [smem:[#allocation0]]
  $region46: #{tpu_custom_call.1} parent=0
    _
  %s8 = ssub.s32 1, %s6
  %s9 = scalar_select 0, %s8, %s6
  $region1: #{tpu_custom_call.1} parent=0
    #allocation2 [shape = 'u8[32768]{0}', space=vmem, size = 0x8000, scoped, tag = 'input window, operand 0, single buffered']
    #allocation3 [shape = 's32[1]{0}', space=sflag, size = 0x4, scoped, tag = 'scoped memory for tpu_custom_call.1']
    #allocation4 [shape = 's32[1]{0}', space=sflag, size = 0x4, scoped, tag = 'scoped memory for tpu_custom_call.1']
    #allocation5 [shape = 'u8[32768]{0}', space=vmem, size = 0x8000, scoped, tag = 'input window, operand 1, single buffered']
    #allocation6 [shape = 's32[1]{0}', space=sflag, size = 0x4, scoped, tag = 'scoped memory for tpu_custom_call.1']
    #allocation7 [shape = 'u8[1024]{0}', space=vmem, size = 0x400, scoped, tag = 'input window, operand 2, single buffered']
    #allocation8 [shape = 'u8[458752]{0}', space=vmem, size = 0x70000, scoped, tag = 'input window, operand 3, single buffered']
    #allocation9 [shape = 's32[1]{0}', space=sflag, size = 0x4, scoped, tag = 'scoped memory for tpu_custom_call.1']
    #allocation10 [shape = 'u8[114688]{0}', space=vmem, size = 0x1c000, scoped, tag = 'output window, operand 0, single buffered']
    %10 = vsyncpa [#allocation3], 0
    %11 = vsyncpa [#allocation6], 0
    %12 = vsyncpa [#allocation9], 0
    %13 = vsyncpa [#allocation4], 0
    // Predicated region
    $region2: #{tpu_custom_call.1} parent=1 // pred_check
      _
    $region3: #{tpu_custom_call.1} parent=1 // pred_check_branch
      %15 = sbr.rel (0) target = $region5
    $region4: #{tpu_custom_call.1} parent=1 // pred_region
      %s17 = ssub.s32 1024, 1024
      %18 = vsyncadd [#allocation3], %s17
      %s19 = sshll.u32 [#allocation2], 4
      %s20 = int_to_ptr.vmem [resolvable:$true] %s19
      %25 = dma.hbm_to_vmem [thread:$0]  %s0, 1024, %s20, [#allocation3], 128, 128, 8
    $region5: #{tpu_custom_call.1} parent=1 // pred_fallthru
      _
    // Predicated region
    $region6: #{tpu_custom_call.1} parent=1 // pred_check
      _
    $region7: #{tpu_custom_call.1} parent=1 // pred_check_branch
      %27 = sbr.rel (0) target = $region9
    $region8: #{tpu_custom_call.1} parent=1 // pred_region
      %s29 = ssub.s32 1024, 1024
      %30 = vsyncadd [#allocation6], %s29
      %s31 = sshll.u32 [#allocation5], 4
      %s32 = int_to_ptr.vmem [resolvable:$true] %s31
      %37 = dma.hbm_to_vmem [thread:$0]  %s1, 1024, %s32, [#allocation6], 128, 128, 8
    $region9: #{tpu_custom_call.1} parent=1 // pred_fallthru
      _
    // Predicated region
    $region10: #{tpu_custom_call.1} parent=1 // pred_check
      _
    $region11: #{tpu_custom_call.1} parent=1 // pred_check_branch
      %39 = sbr.rel (0) target = $region13
    $region12: #{tpu_custom_call.1} parent=1 // pred_region
      %s41 = ssub.s32 32, 32
      %42 = vsyncadd [#allocation6], %s41
      %s44 = sshll.u32 [#allocation7], 4
      %s45 = int_to_ptr.vmem [resolvable:$true] %s44
      %47 = dma.hbm_to_vmem [thread:$0]  %s2, 32, %s45, [#allocation6]
    $region13: #{tpu_custom_call.1} parent=1 // pred_fallthru
      _
    // Predicated region
    $region14: #{tpu_custom_call.1} parent=1 // pred_check
      _
    $region15: #{tpu_custom_call.1} parent=1 // pred_check_branch
      %49 = sbr.rel (0) target = $region17
    $region16: #{tpu_custom_call.1} parent=1 // pred_region
      %s51 = ssub.s32 14336, 14336
      %52 = vsyncadd [#allocation9], %s51
      %s53 = sshll.u32 [#allocation8], 4
      %s54 = int_to_ptr.vmem [resolvable:$true] %s53
      %59 = dma.hbm_to_vmem [thread:$0]  %s3, 14336, %s54, [#allocation9], 448, 448, 28
    $region17: #{tpu_custom_call.1} parent=1 // pred_fallthru
      _
    // Predicated region
    $region18: #{tpu_custom_call.1} parent=1 // pred_check
      _
    $region19: #{tpu_custom_call.1} parent=1 // pred_check_branch
      %61 = sbr.rel (0) target = $region21
    $region20: #{tpu_custom_call.1} parent=1 // pred_region
      _
    $region21: #{tpu_custom_call.1} parent=1 // pred_fallthru
      _
    // Predicated region
    $region22: #{tpu_custom_call.1} parent=1 // pred_check
      _
    $region23: #{tpu_custom_call.1} parent=1 // pred_check_branch
      %63 = sbr.rel (0) target = $region25
    $region24: #{tpu_custom_call.1} parent=1 // pred_region
      %64 = dma.done [#allocation3], 1024
    $region25: #{tpu_custom_call.1} parent=1 // pred_fallthru
      _
    // Predicated region
    $region26: #{tpu_custom_call.1} parent=1 // pred_check
      _
    $region27: #{tpu_custom_call.1} parent=1 // pred_check_branch
      %66 = sbr.rel (0) target = $region29
    $region28: #{tpu_custom_call.1} parent=1 // pred_region
      %67 = dma.done [#allocation6], 1024
    $region29: #{tpu_custom_call.1} parent=1 // pred_fallthru
      _
    // Predicated region
    $region30: #{tpu_custom_call.1} parent=1 // pred_check
      _
    $region31: #{tpu_custom_call.1} parent=1 // pred_check_branch
      %69 = sbr.rel (0) target = $region33
    $region32: #{tpu_custom_call.1} parent=1 // pred_region
      %70 = dma.done [#allocation6], 32
    $region33: #{tpu_custom_call.1} parent=1 // pred_fallthru
      _
    // Predicated region
    $region34: #{tpu_custom_call.1} parent=1 // pred_check
      _
    $region35: #{tpu_custom_call.1} parent=1 // pred_check_branch
      %72 = sbr.rel (0) target = $region37
    $region36: #{tpu_custom_call.1} parent=1 // pred_region
      %73 = dma.done [#allocation9], 14336
    $region37: #{tpu_custom_call.1} parent=1 // pred_fallthru
      _
    %v75 = vld [vmem:[#allocation2] sm:$0xff]
    %v76 = vld [vmem:[#allocation2 + $0x8] sm:$0xff]
    %v77 = vld [vmem:[#allocation2 + $0x10] sm:$0xff]
    %v78 = vld [vmem:[#allocation2 + $0x18] sm:$0xff]
    %v79 = vld [vmem:[#allocation2 + $0x20] sm:$0xff]
    %v80 = vld [vmem:[#allocation2 + $0x28] sm:$0xff]
    %v81 = vld [vmem:[#allocation2 + $0x30] sm:$0xff]
    %v82 = vld [vmem:[#allocation2 + $0x38] sm:$0xff]
    %v83 = vpack.c.bf16 %v76, %v75
    %v84 = vpack.c.bf16 %v78, %v77
    %v85 = vpack.c.bf16 %v80, %v79
    %v86 = vpack.c.bf16 %v82, %v81
    %v87 = vld [vmem:[#allocation5] sm:$0xff]
    %v88 = vld [vmem:[#allocation5 + $0x8] sm:$0xff]
    %v89 = vld [vmem:[#allocation5 + $0x10] sm:$0xff]
    %v90 = vld [vmem:[#allocation5 + $0x18] sm:$0xff]
    %v91 = vld [vmem:[#allocation5 + $0x20] sm:$0xff]
    %v92 = vld [vmem:[#allocation5 + $0x28] sm:$0xff]
    %v93 = vld [vmem:[#allocation5 + $0x30] sm:$0xff]
    %v94 = vld [vmem:[#allocation5 + $0x38] sm:$0xff]
    %v95 = vld [vmem:[#allocation7] sm:$0x3]
    %v97 = vlaneseq
    %v98 = vshrl.u32 %v97, 7
    %v99 = vsub.s32 0, %v98
    %v100 = vrot.slane %v95, %v99
    %v101 = vlaneseq
    %v102 = vshrl.u32 %v101, 7
    %v103 = vsub.s32 1, %v102
    %v104 = vrot.slane %v95, %v103
    %v115 = vunpack.c.l.b16 %v87
    %v116 = vunpack.c.h.b16 %v87
    %v117 = vunpack.c.l.b16 %v88
    %v118 = vunpack.c.h.b16 %v88
    %v119 = vunpack.c.l.b16 %v89
    %v120 = vunpack.c.h.b16 %v89
    %v121 = vunpack.c.l.b16 %v90
    %v122 = vunpack.c.h.b16 %v90
    %v123 = vunpack.c.l.b16 %v91
    %v124 = vunpack.c.h.b16 %v91
    %v125 = vunpack.c.l.b16 %v92
    %v126 = vunpack.c.h.b16 %v92
    %v127 = vunpack.c.l.b16 %v93
    %v128 = vunpack.c.h.b16 %v93
    %v129 = vunpack.c.l.b16 %v94
    %v130 = vunpack.c.h.b16 %v94
    %v131 = vpack.c.b16 %v117, %v115
    %v132 = vpack.c.b16 %v118, %v116
    %v133 = vpack.c.b16 %v121, %v119
    %v134 = vpack.c.b16 %v122, %v120
    %v135 = vpack.c.b16 %v125, %v123
    %v136 = vpack.c.b16 %v126, %v124
    %v137 = vpack.c.b16 %v129, %v127
    %v138 = vpack.c.b16 %v130, %v128
    %vm147 = vcmask 523264
    %v149 = vsel %vm147, %v83, 0
    %v152 = vsel %vm147, %v84, 0
    %v155 = vsel %vm147, %v85, 0
    %v158 = vsel %vm147, %v86, 0
    %160 = vmatprep.subr.bf16.mxu0 0
    %161 = vmatpush1.bf16.msra.mxu0 0
    %162 = vmatprep.subr.bf16.mxu0 0
    %163 = vmatpush1.bf16.msra.mxu0 0
    %164 = vmatprep.subr.bf16.mxu0 0
    %165 = vmatpush1.bf16.msra.mxu0 0
    %166 = vmatprep.subr.bf16.mxu0 0
    %167 = vmatpush1.bf16.msra.mxu0 0
    %168 = vmatprep.subr.bf16.mxu0 %v138
    %169 = vmatpush1.bf16.msra.mxu0 %v137
    %170 = vmatprep.subr.bf16.mxu0 %v136
    %171 = vmatpush1.bf16.msra.mxu0 %v135
    %172 = vmatprep.subr.bf16.mxu0 %v134
    %173 = vmatpush1.bf16.msra.mxu0 %v133
    %174 = vmatprep.subr.bf16.mxu0 %v132
    %175 = vmatpush1.bf16.msra.mxu0 %v131
    %176 = vmatprep.subr.bf16.mxu0 0
    %177 = vmatpush2.bf16.msra.mxu0 0
    %178 = vmatprep.subr.bf16.mxu0 0
    %179 = vmatpush2.bf16.msra.mxu0 0
    %180 = vmatprep.subr.bf16.mxu0 0
    %181 = vmatpush2.bf16.msra.mxu0 0
    %182 = vmatprep.subr.bf16.mxu0 0
    %183 = vmatpush2.bf16.msra.mxu0 0
    %184 = vmatprep.subr.bf16.mxu0 0
    %185 = vmatpush2.bf16.msra.mxu0 0
    %186 = vmatprep.subr.bf16.mxu0 0
    %187 = vmatpush2.bf16.msra.mxu0 0
    %188 = vmatprep.subr.bf16.mxu0 0
    %189 = vmatpush2.bf16.msra.mxu0 0
    %190 = vmatprep.subr.bf16.mxu0 0
    %191 = vmatpush2.bf16.msra.mxu0 0
    %192 = vmatprep.mubr.bf16.mxu0 0
    %193 = vmatmul.mubr.bf16.gmra.mxu0 %v149
    %v194 = vpop.f32.mrf.mxu0
    %v195 = vadd.f32 %v100, %v194
    %v196 = vpop.f32.mrf.mxu0
    %v197 = vadd.f32 %v104, %v196
    %v198 = vpop.f32.mrf.mxu0
    %v199 = vadd.f32 %v100, %v198
    %v200 = vpop.f32.mrf.mxu0
    %v201 = vadd.f32 %v104, %v200
    %202 = vmatprep.mubr.bf16.mxu0 0
    %203 = vmatmul.mubr.bf16.gmra.mxu0 %v152
    %v204 = vpop.f32.mrf.mxu0
    %v205 = vadd.f32 %v100, %v204
    %v206 = vpop.f32.mrf.mxu0
    %v207 = vadd.f32 %v104, %v206
    %v208 = vpop.f32.mrf.mxu0
    %v209 = vadd.f32 %v100, %v208
    %v210 = vpop.f32.mrf.mxu0
    %v211 = vadd.f32 %v104, %v210
    %212 = vmatprep.mubr.bf16.mxu0 0
    %213 = vmatmul.mubr.bf16.gmra.mxu0 %v155
    %v214 = vpop.f32.mrf.mxu0
    %v215 = vadd.f32 %v100, %v214
    %v216 = vpop.f32.mrf.mxu0
    %v217 = vadd.f32 %v104, %v216
    %v218 = vpop.f32.mrf.mxu0
    %v219 = vadd.f32 %v100, %v218
    %v220 = vpop.f32.mrf.mxu0
    %v221 = vadd.f32 %v104, %v220
    %222 = vmatprep.mubr.bf16.mxu0 0
    %223 = vmatmul.mubr.bf16.gmra.mxu0 %v158
    %v224 = vpop.f32.mrf.mxu0
    %v225 = vadd.f32 %v100, %v224
    %v226 = vpop.f32.mrf.mxu0
    %v227 = vadd.f32 %v104, %v226
    %v228 = vpop.f32.mrf.mxu0
    %v229 = vadd.f32 %v100, %v228
    %v230 = vpop.f32.mrf.mxu0
    %v231 = vadd.f32 %v104, %v230
    %232 = vdwg.mxu0
    %v233 = vmul.f32 %v195, 0.1
    %v234 = vmul.f32 %v197, 0.1
    %v235 = vmul.f32 %v199, 0.1
    %v236 = vmul.f32 %v201, 0.1
    %v237 = vmul.f32 %v205, 0.1
    %v238 = vmul.f32 %v207, 0.1
    %v239 = vmul.f32 %v209, 0.1
    %v240 = vmul.f32 %v211, 0.1
    %v241 = vmul.f32 %v215, 0.1
    %v242 = vmul.f32 %v217, 0.1
    %v243 = vmul.f32 %v219, 0.1
    %v244 = vmul.f32 %v221, 0.1
    %v245 = vmul.f32 %v225, 0.1
    %v246 = vmul.f32 %v227, 0.1
    %v247 = vmul.f32 %v229, 0.1
    %v248 = vmul.f32 %v231, 0.1
    %v249 = vmax.f32 %v195, %v233
    %v250 = vmax.f32 %v197, %v234
    %v251 = vmax.f32 %v199, %v235
    %v252 = vmax.f32 %v201, %v236
    %v253 = vmax.f32 %v205, %v237
    %v254 = vmax.f32 %v207, %v238
    %v255 = vmax.f32 %v209, %v239
    %v256 = vmax.f32 %v211, %v240
    %v257 = vmax.f32 %v215, %v241
    %v258 = vmax.f32 %v217, %v242
    %v259 = vmax.f32 %v219, %v243
    %v260 = vmax.f32 %v221, %v244
    %v261 = vmax.f32 %v225, %v245
    %v262 = vmax.f32 %v227, %v246
    %v263 = vmax.f32 %v229, %v247
    %v264 = vmax.f32 %v231, %v248
    %v265 = vpack.c.bf16 %v251, %v249
    %v266 = vpack.c.bf16 %v252, %v250
    %v267 = vpack.c.bf16 %v255, %v253
    %v268 = vpack.c.bf16 %v256, %v254
    %v269 = vpack.c.bf16 %v259, %v257
    %v270 = vpack.c.bf16 %v260, %v258
    %v271 = vpack.c.bf16 %v263, %v261
    %v272 = vpack.c.bf16 %v264, %v262
    %v273 = vld [vmem:[#allocation8] sm:$0xff]
    %v274 = vld [vmem:[#allocation8 + $0x8] sm:$0xff]
    %v275 = vld [vmem:[#allocation8 + $0x10] sm:$0xff]
    %v276 = vld [vmem:[#allocation8 + $0x18] sm:$0xf]
    %v277 = vld [vmem:[#allocation8 + $0x1c] sm:$0xff]
    %v278 = vld [vmem:[#allocation8 + $0x24] sm:$0xff]
    %v279 = vld [vmem:[#allocation8 + $0x2c] sm:$0xff]
    %v280 = vld [vmem:[#allocation8 + $0x34] sm:$0xf]
    %v281 = vld [vmem:[#allocation8 + $0x38] sm:$0xff]
    %v282 = vld [vmem:[#allocation8 + $0x40] sm:$0xff]
    %v283 = vld [vmem:[#allocation8 + $0x48] sm:$0xff]
    %v284 = vld [vmem:[#allocation8 + $0x50] sm:$0xf]
    %v285 = vld [vmem:[#allocation8 + $0x54] sm:$0xff]
    %v286 = vld [vmem:[#allocation8 + $0x5c] sm:$0xff]
    %v287 = vld [vmem:[#allocation8 + $0x64] sm:$0xff]
    %v288 = vld [vmem:[#allocation8 + $0x6c] sm:$0xf]
    %v289 = vld [vmem:[#allocation8 + $0x70] sm:$0xff]
    %v290 = vld [vmem:[#allocation8 + $0x78] sm:$0xff]
    %v291 = vld [vmem:[#allocation8 + $0x80] sm:$0xff]
    %v292 = vld [vmem:[#allocation8 + $0x88] sm:$0xf]
    %v293 = vld [vmem:[#allocation8 + $0x8c] sm:$0xff]
    %v294 = vld [vmem:[#allocation8 + $0x94] sm:$0xff]
    %v295 = vld [vmem:[#allocation8 + $0x9c] sm:$0xff]
    %v296 = vld [vmem:[#allocation8 + $0xa4] sm:$0xf]
    %v297 = vld [vmem:[#allocation8 + $0xa8] sm:$0xff]
    %v298 = vld [vmem:[#allocation8 + $0xb0] sm:$0xff]
    %v299 = vld [vmem:[#allocation8 + $0xb8] sm:$0xff]
    %v300 = vld [vmem:[#allocation8 + $0xc0] sm:$0xf]
    %v301 = vld [vmem:[#allocation8 + $0xc4] sm:$0xff]
    %v302 = vld [vmem:[#allocation8 + $0xcc] sm:$0xff]
    %v303 = vld [vmem:[#allocation8 + $0xd4] sm:$0xff]
    %v304 = vld [vmem:[#allocation8 + $0xdc] sm:$0xf]
    %v305 = vld [vmem:[#allocation8 + $0xe0] sm:$0xff]
    %v306 = vld [vmem:[#allocation8 + $0xe8] sm:$0xff]
    %v307 = vld [vmem:[#allocation8 + $0xf0] sm:$0xff]
    %v308 = vld [vmem:[#allocation8 + $0xf8] sm:$0xf]
    %v309 = vld [vmem:[#allocation8 + $0xfc] sm:$0xff]
    %v310 = vld [vmem:[#allocation8 + $0x104] sm:$0xff]
    %v311 = vld [vmem:[#allocation8 + $0x10c] sm:$0xff]
    %v312 = vld [vmem:[#allocation8 + $0x114] sm:$0xf]
    %v313 = vld [vmem:[#allocation8 + $0x118] sm:$0xff]
    %v314 = vld [vmem:[#allocation8 + $0x120] sm:$0xff]
    %v315 = vld [vmem:[#allocation8 + $0x128] sm:$0xff]
    %v316 = vld [vmem:[#allocation8 + $0x130] sm:$0xf]
    %v317 = vld [vmem:[#allocation8 + $0x134] sm:$0xff]
    %v318 = vld [vmem:[#allocation8 + $0x13c] sm:$0xff]
    %v319 = vld [vmem:[#allocation8 + $0x144] sm:$0xff]
    %v320 = vld [vmem:[#allocation8 + $0x14c] sm:$0xf]
    %v321 = vld [vmem:[#allocation8 + $0x150] sm:$0xff]
    %v322 = vld [vmem:[#allocation8 + $0x158] sm:$0xff]
    %v323 = vld [vmem:[#allocation8 + $0x160] sm:$0xff]
    %v324 = vld [vmem:[#allocation8 + $0x168] sm:$0xf]
    %v325 = vld [vmem:[#allocation8 + $0x16c] sm:$0xff]
    %v326 = vld [vmem:[#allocation8 + $0x174] sm:$0xff]
    %v327 = vld [vmem:[#allocation8 + $0x17c] sm:$0xff]
    %v328 = vld [vmem:[#allocation8 + $0x184] sm:$0xf]
    %v329 = vld [vmem:[#allocation8 + $0x188] sm:$0xff]
    %v330 = vld [vmem:[#allocation8 + $0x190] sm:$0xff]
    %v331 = vld [vmem:[#allocation8 + $0x198] sm:$0xff]
    %v332 = vld [vmem:[#allocation8 + $0x1a0] sm:$0xf]
    %v333 = vld [vmem:[#allocation8 + $0x1a4] sm:$0xff]
    %v334 = vld [vmem:[#allocation8 + $0x1ac] sm:$0xff]
    %v335 = vld [vmem:[#allocation8 + $0x1b4] sm:$0xff]
    %v336 = vld [vmem:[#allocation8 + $0x1bc] sm:$0xf]
    %v337 = vld [vmem:[#allocation8 + $0x1c0] sm:$0xff]
    %v338 = vld [vmem:[#allocation8 + $0x1c8] sm:$0xff]
    %v339 = vld [vmem:[#allocation8 + $0x1d0] sm:$0xff]
    %v340 = vld [vmem:[#allocation8 + $0x1d8] sm:$0xf]
    %v341 = vld [vmem:[#allocation8 + $0x1dc] sm:$0xff]
    %v342 = vld [vmem:[#allocation8 + $0x1e4] sm:$0xff]
    %v343 = vld [vmem:[#allocation8 + $0x1ec] sm:$0xff]
    %v344 = vld [vmem:[#allocation8 + $0x1f4] sm:$0xf]
    %v345 = vld [vmem:[#allocation8 + $0x1f8] sm:$0xff]
    %v346 = vld [vmem:[#allocation8 + $0x200] sm:$0xff]
    %v347 = vld [vmem:[#allocation8 + $0x208] sm:$0xff]
    %v348 = vld [vmem:[#allocation8 + $0x210] sm:$0xf]
    %v349 = vld [vmem:[#allocation8 + $0x214] sm:$0xff]
    %v350 = vld [vmem:[#allocation8 + $0x21c] sm:$0xff]
    %v351 = vld [vmem:[#allocation8 + $0x224] sm:$0xff]
    %v352 = vld [vmem:[#allocation8 + $0x22c] sm:$0xf]
    %v353 = vld [vmem:[#allocation8 + $0x230] sm:$0xff]
    %v354 = vld [vmem:[#allocation8 + $0x238] sm:$0xff]
    %v355 = vld [vmem:[#allocation8 + $0x240] sm:$0xff]
    %v356 = vld [vmem:[#allocation8 + $0x248] sm:$0xf]
    %v357 = vld [vmem:[#allocation8 + $0x24c] sm:$0xff]
    %v358 = vld [vmem:[#allocation8 + $0x254] sm:$0xff]
    %v359 = vld [vmem:[#allocation8 + $0x25c] sm:$0xff]
    %v360 = vld [vmem:[#allocation8 + $0x264] sm:$0xf]
    %v361 = vld [vmem:[#allocation8 + $0x268] sm:$0xff]
    %v362 = vld [vmem:[#allocation8 + $0x270] sm:$0xff]
    %v363 = vld [vmem:[#allocation8 + $0x278] sm:$0xff]
    %v364 = vld [vmem:[#allocation8 + $0x280] sm:$0xf]
    %v365 = vld [vmem:[#allocation8 + $0x284] sm:$0xff]
    %v366 = vld [vmem:[#allocation8 + $0x28c] sm:$0xff]
    %v367 = vld [vmem:[#allocation8 + $0x294] sm:$0xff]
    %v368 = vld [vmem:[#allocation8 + $0x29c] sm:$0xf]
    %v369 = vld [vmem:[#allocation8 + $0x2a0] sm:$0xff]
    %v370 = vld [vmem:[#allocation8 + $0x2a8] sm:$0xff]
    %v371 = vld [vmem:[#allocation8 + $0x2b0] sm:$0xff]
    %v372 = vld [vmem:[#allocation8 + $0x2b8] sm:$0xf]
    %v373 = vld [vmem:[#allocation8 + $0x2bc] sm:$0xff]
    %v374 = vld [vmem:[#allocation8 + $0x2c4] sm:$0xff]
    %v375 = vld [vmem:[#allocation8 + $0x2cc] sm:$0xff]
    %v376 = vld [vmem:[#allocation8 + $0x2d4] sm:$0xf]
    %v377 = vld [vmem:[#allocation8 + $0x2d8] sm:$0xff]
    %v378 = vld [vmem:[#allocation8 + $0x2e0] sm:$0xff]
    %v379 = vld [vmem:[#allocation8 + $0x2e8] sm:$0xff]
    %v380 = vld [vmem:[#allocation8 + $0x2f0] sm:$0xf]
    %v381 = vld [vmem:[#allocation8 + $0x2f4] sm:$0xff]
    %v382 = vld [vmem:[#allocation8 + $0x2fc] sm:$0xff]
    %v383 = vld [vmem:[#allocation8 + $0x304] sm:$0xff]
    %v384 = vld [vmem:[#allocation8 + $0x30c] sm:$0xf]
    %v385 = vld [vmem:[#allocation8 + $0x310] sm:$0xff]
    %v386 = vld [vmem:[#allocation8 + $0x318] sm:$0xff]
    %v387 = vld [vmem:[#allocation8 + $0x320] sm:$0xff]
    %v388 = vld [vmem:[#allocation8 + $0x328] sm:$0xf]
    %v389 = vld [vmem:[#allocation8 + $0x32c] sm:$0xff]
    %v390 = vld [vmem:[#allocation8 + $0x334] sm:$0xff]
    %v391 = vld [vmem:[#allocation8 + $0x33c] sm:$0xff]
    %v392 = vld [vmem:[#allocation8 + $0x344] sm:$0xf]
    %v393 = vld [vmem:[#allocation8 + $0x348] sm:$0xff]
    %v394 = vld [vmem:[#allocation8 + $0x350] sm:$0xff]
    %v395 = vld [vmem:[#allocation8 + $0x358] sm:$0xff]
    %v396 = vld [vmem:[#allocation8 + $0x360] sm:$0xf]
    %v397 = vld [vmem:[#allocation8 + $0x364] sm:$0xff]
    %v398 = vld [vmem:[#allocation8 + $0x36c] sm:$0xff]
    %v399 = vld [vmem:[#allocation8 + $0x374] sm:$0xff]
    %v400 = vld [vmem:[#allocation8 + $0x37c] sm:$0xf]
    %v401 = vld [vmem:[%s4] sm:$0xff]
    %v403 = vlaneseq
    %v404 = vshrl.u32 %v403, 7
    %v405 = vsub.s32 0, %v404
    %v406 = vrot.slane %v401, %v405
    %v407 = vlaneseq
    %v408 = vshrl.u32 %v407, 7
    %v409 = vsub.s32 1, %v408
    %v410 = vrot.slane %v401, %v409
    %v411 = vlaneseq
    %v412 = vshrl.u32 %v411, 7
    %v413 = vsub.s32 2, %v412
    %v414 = vrot.slane %v401, %v413
    %v415 = vlaneseq
    %v416 = vshrl.u32 %v415, 7
    %v417 = vsub.s32 3, %v416
    %v418 = vrot.slane %v401, %v417
    %v419 = vlaneseq
    %v420 = vshrl.u32 %v419, 7
    %v421 = vsub.s32 4, %v420
    %v422 = vrot.slane %v401, %v421
    %v423 = vlaneseq
    %v424 = vshrl.u32 %v423, 7
    %v425 = vsub.s32 5, %v424
    %v426 = vrot.slane %v401, %v425
    %v427 = vlaneseq
    %v428 = vshrl.u32 %v427, 7
    %v429 = vsub.s32 6, %v428
    %v430 = vrot.slane %v401, %v429
    %v566 = vunpack.c.l.b16 %v273
    %v567 = vunpack.c.h.b16 %v273
    %v568 = vunpack.c.l.b16 %v274
    %v569 = vunpack.c.h.b16 %v274
    %v570 = vunpack.c.l.b16 %v275
    %v571 = vunpack.c.h.b16 %v275
    %v572 = vunpack.c.l.b16 %v276
    %v573 = vunpack.c.l.b16 %v277
    %v574 = vunpack.c.h.b16 %v277
    %v575 = vunpack.c.l.b16 %v278
    %v576 = vunpack.c.h.b16 %v278
    %v577 = vunpack.c.l.b16 %v279
    %v578 = vunpack.c.h.b16 %v279
    %v579 = vunpack.c.l.b16 %v280
    %v580 = vunpack.c.l.b16 %v281
    %v581 = vunpack.c.h.b16 %v281
    %v582 = vunpack.c.l.b16 %v282
    %v583 = vunpack.c.h.b16 %v282
    %v584 = vunpack.c.l.b16 %v283
    %v585 = vunpack.c.h.b16 %v283
    %v586 = vunpack.c.l.b16 %v284
    %v587 = vunpack.c.l.b16 %v285
    %v588 = vunpack.c.h.b16 %v285
    %v589 = vunpack.c.l.b16 %v286
    %v590 = vunpack.c.h.b16 %v286
    %v591 = vunpack.c.l.b16 %v287
    %v592 = vunpack.c.h.b16 %v287
    %v593 = vunpack.c.l.b16 %v288
    %v594 = vunpack.c.l.b16 %v289
    %v595 = vunpack.c.h.b16 %v289
    %v596 = vunpack.c.l.b16 %v290
    %v597 = vunpack.c.h.b16 %v290
    %v598 = vunpack.c.l.b16 %v291
    %v599 = vunpack.c.h.b16 %v291
    %v600 = vunpack.c.l.b16 %v292
    %v601 = vunpack.c.l.b16 %v293
    %v602 = vunpack.c.h.b16 %v293
    %v603 = vunpack.c.l.b16 %v294
    %v604 = vunpack.c.h.b16 %v294
    %v605 = vunpack.c.l.b16 %v295
    %v606 = vunpack.c.h.b16 %v295
    %v607 = vunpack.c.l.b16 %v296
    %v608 = vunpack.c.l.b16 %v297
    %v609 = vunpack.c.h.b16 %v297
    %v610 = vunpack.c.l.b16 %v298
    %v611 = vunpack.c.h.b16 %v298
    %v612 = vunpack.c.l.b16 %v299
    %v613 = vunpack.c.h.b16 %v299
    %v614 = vunpack.c.l.b16 %v300
    %v615 = vunpack.c.l.b16 %v301
    %v616 = vunpack.c.h.b16 %v301
    %v617 = vunpack.c.l.b16 %v302
    %v618 = vunpack.c.h.b16 %v302
    %v619 = vunpack.c.l.b16 %v303
    %v620 = vunpack.c.h.b16 %v303
    %v621 = vunpack.c.l.b16 %v304
    %v622 = vunpack.c.l.b16 %v305
    %v623 = vunpack.c.h.b16 %v305
    %v624 = vunpack.c.l.b16 %v306
    %v625 = vunpack.c.h.b16 %v306
    %v626 = vunpack.c.l.b16 %v307
    %v627 = vunpack.c.h.b16 %v307
    %v628 = vunpack.c.l.b16 %v308
    %v629 = vunpack.c.l.b16 %v309
    %v630 = vunpack.c.h.b16 %v309
    %v631 = vunpack.c.l.b16 %v310
    %v632 = vunpack.c.h.b16 %v310
    %v633 = vunpack.c.l.b16 %v311
    %v634 = vunpack.c.h.b16 %v311
    %v635 = vunpack.c.l.b16 %v312
    %v636 = vunpack.c.l.b16 %v313
    %v637 = vunpack.c.h.b16 %v313
    %v638 = vunpack.c.l.b16 %v314
    %v639 = vunpack.c.h.b16 %v314
    %v640 = vunpack.c.l.b16 %v315
    %v641 = vunpack.c.h.b16 %v315
    %v642 = vunpack.c.l.b16 %v316
    %v643 = vunpack.c.l.b16 %v317
    %v644 = vunpack.c.h.b16 %v317
    %v645 = vunpack.c.l.b16 %v318
    %v646 = vunpack.c.h.b16 %v318
    %v647 = vunpack.c.l.b16 %v319
    %v648 = vunpack.c.h.b16 %v319
    %v649 = vunpack.c.l.b16 %v320
    %v650 = vunpack.c.l.b16 %v321
    %v651 = vunpack.c.h.b16 %v321
    %v652 = vunpack.c.l.b16 %v322
    %v653 = vunpack.c.h.b16 %v322
    %v654 = vunpack.c.l.b16 %v323
    %v655 = vunpack.c.h.b16 %v323
    %v656 = vunpack.c.l.b16 %v324
    %v657 = vunpack.c.l.b16 %v325
    %v658 = vunpack.c.h.b16 %v325
    %v659 = vunpack.c.l.b16 %v326
    %v660 = vunpack.c.h.b16 %v326
    %v661 = vunpack.c.l.b16 %v327
    %v662 = vunpack.c.h.b16 %v327
    %v663 = vunpack.c.l.b16 %v328
    %v664 = vunpack.c.l.b16 %v329
    %v665 = vunpack.c.h.b16 %v329
    %v666 = vunpack.c.l.b16 %v330
    %v667 = vunpack.c.h.b16 %v330
    %v668 = vunpack.c.l.b16 %v331
    %v669 = vunpack.c.h.b16 %v331
    %v670 = vunpack.c.l.b16 %v332
    %v671 = vunpack.c.l.b16 %v333
    %v672 = vunpack.c.h.b16 %v333
    %v673 = vunpack.c.l.b16 %v334
    %v674 = vunpack.c.h.b16 %v334
    %v675 = vunpack.c.l.b16 %v335
    %v676 = vunpack.c.h.b16 %v335
    %v677 = vunpack.c.l.b16 %v336
    %v678 = vunpack.c.l.b16 %v337
    %v679 = vunpack.c.h.b16 %v337
    %v680 = vunpack.c.l.b16 %v338
    %v681 = vunpack.c.h.b16 %v338
    %v682 = vunpack.c.l.b16 %v339
    %v683 = vunpack.c.h.b16 %v339
    %v684 = vunpack.c.l.b16 %v340
    %v685 = vunpack.c.l.b16 %v341
    %v686 = vunpack.c.h.b16 %v341
    %v687 = vunpack.c.l.b16 %v342
    %v688 = vunpack.c.h.b16 %v342
    %v689 = vunpack.c.l.b16 %v343
    %v690 = vunpack.c.h.b16 %v343
    %v691 = vunpack.c.l.b16 %v344
    %v692 = vunpack.c.l.b16 %v345
    %v693 = vunpack.c.h.b16 %v345
    %v694 = vunpack.c.l.b16 %v346
    %v695 = vunpack.c.h.b16 %v346
    %v696 = vunpack.c.l.b16 %v347
    %v697 = vunpack.c.h.b16 %v347
    %v698 = vunpack.c.l.b16 %v348
    %v699 = vunpack.c.l.b16 %v349
    %v700 = vunpack.c.h.b16 %v349
    %v701 = vunpack.c.l.b16 %v350
    %v702 = vunpack.c.h.b16 %v350
    %v703 = vunpack.c.l.b16 %v351
    %v704 = vunpack.c.h.b16 %v351
    %v705 = vunpack.c.l.b16 %v352
    %v706 = vunpack.c.l.b16 %v353
    %v707 = vunpack.c.h.b16 %v353
    %v708 = vunpack.c.l.b16 %v354
    %v709 = vunpack.c.h.b16 %v354
    %v710 = vunpack.c.l.b16 %v355
    %v711 = vunpack.c.h.b16 %v355
    %v712 = vunpack.c.l.b16 %v356
    %v713 = vunpack.c.l.b16 %v357
    %v714 = vunpack.c.h.b16 %v357
    %v715 = vunpack.c.l.b16 %v358
    %v716 = vunpack.c.h.b16 %v358
    %v717 = vunpack.c.l.b16 %v359
    %v718 = vunpack.c.h.b16 %v359
    %v719 = vunpack.c.l.b16 %v360
    %v720 = vunpack.c.l.b16 %v361
    %v721 = vunpack.c.h.b16 %v361
    %v722 = vunpack.c.l.b16 %v362
    %v723 = vunpack.c.h.b16 %v362
    %v724 = vunpack.c.l.b16 %v363
    %v725 = vunpack.c.h.b16 %v363
    %v726 = vunpack.c.l.b16 %v364
    %v727 = vunpack.c.l.b16 %v365
    %v728 = vunpack.c.h.b16 %v365
    %v729 = vunpack.c.l.b16 %v366
    %v730 = vunpack.c.h.b16 %v366
    %v731 = vunpack.c.l.b16 %v367
    %v732 = vunpack.c.h.b16 %v367
    %v733 = vunpack.c.l.b16 %v368
    %v734 = vunpack.c.l.b16 %v369
    %v735 = vunpack.c.h.b16 %v369
    %v736 = vunpack.c.l.b16 %v370
    %v737 = vunpack.c.h.b16 %v370
    %v738 = vunpack.c.l.b16 %v371
    %v739 = vunpack.c.h.b16 %v371
    %v740 = vunpack.c.l.b16 %v372
    %v741 = vunpack.c.l.b16 %v373
    %v742 = vunpack.c.h.b16 %v373
    %v743 = vunpack.c.l.b16 %v374
    %v744 = vunpack.c.h.b16 %v374
    %v745 = vunpack.c.l.b16 %v375
    %v746 = vunpack.c.h.b16 %v375
    %v747 = vunpack.c.l.b16 %v376
    %v748 = vunpack.c.l.b16 %v377
    %v749 = vunpack.c.h.b16 %v377
    %v750 = vunpack.c.l.b16 %v378
    %v751 = vunpack.c.h.b16 %v378
    %v752 = vunpack.c.l.b16 %v379
    %v753 = vunpack.c.h.b16 %v379
    %v754 = vunpack.c.l.b16 %v380
    %v755 = vunpack.c.l.b16 %v381
    %v756 = vunpack.c.h.b16 %v381
    %v757 = vunpack.c.l.b16 %v382
    %v758 = vunpack.c.h.b16 %v382
    %v759 = vunpack.c.l.b16 %v383
    %v760 = vunpack.c.h.b16 %v383
    %v761 = vunpack.c.l.b16 %v384
    %v762 = vunpack.c.l.b16 %v385
    %v763 = vunpack.c.h.b16 %v385
    %v764 = vunpack.c.l.b16 %v386
    %v765 = vunpack.c.h.b16 %v386
    %v766 = vunpack.c.l.b16 %v387
    %v767 = vunpack.c.h.b16 %v387
    %v768 = vunpack.c.l.b16 %v388
    %v769 = vunpack.c.l.b16 %v389
    %v770 = vunpack.c.h.b16 %v389
    %v771 = vunpack.c.l.b16 %v390
    %v772 = vunpack.c.h.b16 %v390
    %v773 = vunpack.c.l.b16 %v391
    %v774 = vunpack.c.h.b16 %v391
    %v775 = vunpack.c.l.b16 %v392
    %v776 = vunpack.c.l.b16 %v393
    %v777 = vunpack.c.h.b16 %v393
    %v778 = vunpack.c.l.b16 %v394
    %v779 = vunpack.c.h.b16 %v394
    %v780 = vunpack.c.l.b16 %v395
    %v781 = vunpack.c.h.b16 %v395
    %v782 = vunpack.c.l.b16 %v396
    %v783 = vunpack.c.l.b16 %v397
    %v784 = vunpack.c.h.b16 %v397
    %v785 = vunpack.c.l.b16 %v398
    %v786 = vunpack.c.h.b16 %v398
    %v787 = vunpack.c.l.b16 %v399
    %v788 = vunpack.c.h.b16 %v399
    %v789 = vunpack.c.l.b16 %v400
    %v790 = vpack.c.b16 %v573, %v566
    %v791 = vpack.c.b16 %v574, %v567
    %v792 = vpack.c.b16 %v575, %v568
    %v793 = vpack.c.b16 %v576, %v569
    %v794 = vpack.c.b16 %v577, %v570
    %v795 = vpack.c.b16 %v578, %v571
    %v796 = vpack.c.b16 %v579, %v572
    %v797 = vpack.c.b16 %v587, %v580
    %v798 = vpack.c.b16 %v588, %v581
    %v799 = vpack.c.b16 %v589, %v582
    %v800 = vpack.c.b16 %v590, %v583
    %v801 = vpack.c.b16 %v591, %v584
    %v802 = vpack.c.b16 %v592, %v585
    %v803 = vpack.c.b16 %v593, %v586
    %v804 = vpack.c.b16 %v601, %v594
    %v805 = vpack.c.b16 %v602, %v595
    %v806 = vpack.c.b16 %v603, %v596
    %v807 = vpack.c.b16 %v604, %v597
    %v808 = vpack.c.b16 %v605, %v598
    %v809 = vpack.c.b16 %v606, %v599
    %v810 = vpack.c.b16 %v607, %v600
    %v811 = vpack.c.b16 %v615, %v608
    %v812 = vpack.c.b16 %v616, %v609
    %v813 = vpack.c.b16 %v617, %v610
    %v814 = vpack.c.b16 %v618, %v611
    %v815 = vpack.c.b16 %v619, %v612
    %v816 = vpack.c.b16 %v620, %v613
    %v817 = vpack.c.b16 %v621, %v614
    %v818 = vpack.c.b16 %v629, %v622
    %v819 = vpack.c.b16 %v630, %v623
    %v820 = vpack.c.b16 %v631, %v624
    %v821 = vpack.c.b16 %v632, %v625
    %v822 = vpack.c.b16 %v633, %v626
    %v823 = vpack.c.b16 %v634, %v627
    %v824 = vpack.c.b16 %v635, %v628
    %v825 = vpack.c.b16 %v643, %v636
    %v826 = vpack.c.b16 %v644, %v637
    %v827 = vpack.c.b16 %v645, %v638
    %v828 = vpack.c.b16 %v646, %v639
    %v829 = vpack.c.b16 %v647, %v640
    %v830 = vpack.c.b16 %v648, %v641
    %v831 = vpack.c.b16 %v649, %v642
    %v832 = vpack.c.b16 %v657, %v650
    %v833 = vpack.c.b16 %v658, %v651
    %v834 = vpack.c.b16 %v659, %v652
    %v835 = vpack.c.b16 %v660, %v653
    %v836 = vpack.c.b16 %v661, %v654
    %v837 = vpack.c.b16 %v662, %v655
    %v838 = vpack.c.b16 %v663, %v656
    %v839 = vpack.c.b16 %v671, %v664
    %v840 = vpack.c.b16 %v672, %v665
    %v841 = vpack.c.b16 %v673, %v666
    %v842 = vpack.c.b16 %v674, %v667
    %v843 = vpack.c.b16 %v675, %v668
    %v844 = vpack.c.b16 %v676, %v669
    %v845 = vpack.c.b16 %v677, %v670
    %v846 = vpack.c.b16 %v685, %v678
    %v847 = vpack.c.b16 %v686, %v679
    %v848 = vpack.c.b16 %v687, %v680
    %v849 = vpack.c.b16 %v688, %v681
    %v850 = vpack.c.b16 %v689, %v682
    %v851 = vpack.c.b16 %v690, %v683
    %v852 = vpack.c.b16 %v691, %v684
    %v853 = vpack.c.b16 %v699, %v692
    %v854 = vpack.c.b16 %v700, %v693
    %v855 = vpack.c.b16 %v701, %v694
    %v856 = vpack.c.b16 %v702, %v695
    %v857 = vpack.c.b16 %v703, %v696
    %v858 = vpack.c.b16 %v704, %v697
    %v859 = vpack.c.b16 %v705, %v698
    %v860 = vpack.c.b16 %v713, %v706
    %v861 = vpack.c.b16 %v714, %v707
    %v862 = vpack.c.b16 %v715, %v708
    %v863 = vpack.c.b16 %v716, %v709
    %v864 = vpack.c.b16 %v717, %v710
    %v865 = vpack.c.b16 %v718, %v711
    %v866 = vpack.c.b16 %v719, %v712
    %v867 = vpack.c.b16 %v727, %v720
    %v868 = vpack.c.b16 %v728, %v721
    %v869 = vpack.c.b16 %v729, %v722
    %v870 = vpack.c.b16 %v730, %v723
    %v871 = vpack.c.b16 %v731, %v724
    %v872 = vpack.c.b16 %v732, %v725
    %v873 = vpack.c.b16 %v733, %v726
    %v874 = vpack.c.b16 %v741, %v734
    %v875 = vpack.c.b16 %v742, %v735
    %v876 = vpack.c.b16 %v743, %v736
    %v877 = vpack.c.b16 %v744, %v737
    %v878 = vpack.c.b16 %v745, %v738
    %v879 = vpack.c.b16 %v746, %v739
    %v880 = vpack.c.b16 %v747, %v740
    %v881 = vpack.c.b16 %v755, %v748
    %v882 = vpack.c.b16 %v756, %v749
    %v883 = vpack.c.b16 %v757, %v750
    %v884 = vpack.c.b16 %v758, %v751
    %v885 = vpack.c.b16 %v759, %v752
    %v886 = vpack.c.b16 %v760, %v753
    %v887 = vpack.c.b16 %v761, %v754
    %v888 = vpack.c.b16 %v769, %v762
    %v889 = vpack.c.b16 %v770, %v763
    %v890 = vpack.c.b16 %v771, %v764
    %v891 = vpack.c.b16 %v772, %v765
    %v892 = vpack.c.b16 %v773, %v766
    %v893 = vpack.c.b16 %v774, %v767
    %v894 = vpack.c.b16 %v775, %v768
    %v895 = vpack.c.b16 %v783, %v776
    %v896 = vpack.c.b16 %v784, %v777
    %v897 = vpack.c.b16 %v785, %v778
    %v898 = vpack.c.b16 %v786, %v779
    %v899 = vpack.c.b16 %v787, %v780
    %v900 = vpack.c.b16 %v788, %v781
    %v901 = vpack.c.b16 %v789, %v782
    %1014 = vmatprep.subr.bf16.mxu0 %v840
    %1015 = vmatpush1.bf16.msra.mxu0 %v839
    %1016 = vmatprep.subr.bf16.mxu0 %v833
    %1017 = vmatpush1.bf16.msra.mxu0 %v832
    %1018 = vmatprep.subr.bf16.mxu0 %v826
    %1019 = vmatpush1.bf16.msra.mxu0 %v825
    %1020 = vmatprep.subr.bf16.mxu0 %v819
    %1021 = vmatpush1.bf16.msra.mxu0 %v818
    %1022 = vmatprep.subr.bf16.mxu0 %v812
    %1023 = vmatpush1.bf16.msra.mxu0 %v811
    %1024 = vmatprep.subr.bf16.mxu0 %v805
    %1025 = vmatpush1.bf16.msra.mxu0 %v804
    %1026 = vmatprep.subr.bf16.mxu0 %v798
    %1027 = vmatpush1.bf16.msra.mxu0 %v797
    %1028 = vmatprep.subr.bf16.mxu0 %v791
    %1029 = vmatpush1.bf16.msra.mxu0 %v790
    %1030 = vmatprep.subr.bf16.mxu0 %v896
    %1031 = vmatpush2.bf16.msra.mxu0 %v895
    %1032 = vmatprep.subr.bf16.mxu0 %v889
    %1033 = vmatpush2.bf16.msra.mxu0 %v888
    %1034 = vmatprep.subr.bf16.mxu0 %v882
    %1035 = vmatpush2.bf16.msra.mxu0 %v881
    %1036 = vmatprep.subr.bf16.mxu0 %v875
    %1037 = vmatpush2.bf16.msra.mxu0 %v874
    %1038 = vmatprep.subr.bf16.mxu0 %v868
    %1039 = vmatpush2.bf16.msra.mxu0 %v867
    %1040 = vmatprep.subr.bf16.mxu0 %v861
    %1041 = vmatpush2.bf16.msra.mxu0 %v860
    %1042 = vmatprep.subr.bf16.mxu0 %v854
    %1043 = vmatpush2.bf16.msra.mxu0 %v853
    %1044 = vmatprep.subr.bf16.mxu0 %v847
    %1045 = vmatpush2.bf16.msra.mxu0 %v846
    %1046 = vmatprep.mubr.bf16.mxu0 %v266
    %1047 = vmatmul.mubr.bf16.gmra.mxu0 %v265
    %v1048 = vpop.f32.mrf.mxu0
    %v1049 = vadd.f32 %v406, %v1048
    %v1050 = vpop.f32.mrf.mxu0
    %v1051 = vadd.f32 %v410, %v1050
    %v1052 = vpop.f32.mrf.mxu0
    %v1053 = vadd.f32 %v406, %v1052
    %v1054 = vpop.f32.mrf.mxu0
    %v1055 = vadd.f32 %v410, %v1054
    %1056 = vmatprep.mubr.bf16.mxu0 %v268
    %1057 = vmatmul.mubr.bf16.gmra.mxu0 %v267
    %v1058 = vpop.f32.mrf.mxu0
    %v1059 = vadd.f32 %v406, %v1058
    %v1060 = vpop.f32.mrf.mxu0
    %v1061 = vadd.f32 %v410, %v1060
    %v1062 = vpop.f32.mrf.mxu0
    %v1063 = vadd.f32 %v406, %v1062
    %v1064 = vpop.f32.mrf.mxu0
    %v1065 = vadd.f32 %v410, %v1064
    %1066 = vmatprep.mubr.bf16.mxu0 %v270
    %1067 = vmatmul.mubr.bf16.gmra.mxu0 %v269
    %v1068 = vpop.f32.mrf.mxu0
    %v1069 = vadd.f32 %v406, %v1068
    %v1070 = vpop.f32.mrf.mxu0
    %v1071 = vadd.f32 %v410, %v1070
    %v1072 = vpop.f32.mrf.mxu0
    %v1073 = vadd.f32 %v406, %v1072
    %v1074 = vpop.f32.mrf.mxu0
    %v1075 = vadd.f32 %v410, %v1074
    %1076 = vmatprep.mubr.bf16.mxu0 %v272
    %1077 = vmatmul.mubr.bf16.gmra.mxu0 %v271
    %v1078 = vpop.f32.mrf.mxu0
    %v1079 = vadd.f32 %v406, %v1078
    %v1080 = vpop.f32.mrf.mxu0
    %v1081 = vadd.f32 %v410, %v1080
    %v1082 = vpop.f32.mrf.mxu0
    %v1083 = vadd.f32 %v406, %v1082
    %v1084 = vpop.f32.mrf.mxu0
    %v1085 = vadd.f32 %v410, %v1084
    %1086 = vdwg.mxu0
    %1087 = vmatprep.subr.bf16.mxu0 %v842
    %1088 = vmatpush1.bf16.msra.mxu0 %v841
    %1089 = vmatprep.subr.bf16.mxu0 %v835
    %1090 = vmatpush1.bf16.msra.mxu0 %v834
    %1091 = vmatprep.subr.bf16.mxu0 %v828
    %1092 = vmatpush1.bf16.msra.mxu0 %v827
    %1093 = vmatprep.subr.bf16.mxu0 %v821
    %1094 = vmatpush1.bf16.msra.mxu0 %v820
    %1095 = vmatprep.subr.bf16.mxu0 %v814
    %1096 = vmatpush1.bf16.msra.mxu0 %v813
    %1097 = vmatprep.subr.bf16.mxu0 %v807
    %1098 = vmatpush1.bf16.msra.mxu0 %v806
    %1099 = vmatprep.subr.bf16.mxu0 %v800
    %1100 = vmatpush1.bf16.msra.mxu0 %v799
    %1101 = vmatprep.subr.bf16.mxu0 %v793
    %1102 = vmatpush1.bf16.msra.mxu0 %v792
    %1103 = vmatprep.subr.bf16.mxu0 %v898
    %1104 = vmatpush2.bf16.msra.mxu0 %v897
    %1105 = vmatprep.subr.bf16.mxu0 %v891
    %1106 = vmatpush2.bf16.msra.mxu0 %v890
    %1107 = vmatprep.subr.bf16.mxu0 %v884
    %1108 = vmatpush2.bf16.msra.mxu0 %v883
    %1109 = vmatprep.subr.bf16.mxu0 %v877
    %1110 = vmatpush2.bf16.msra.mxu0 %v876
    %1111 = vmatprep.subr.bf16.mxu0 %v870
    %1112 = vmatpush2.bf16.msra.mxu0 %v869
    %1113 = vmatprep.subr.bf16.mxu0 %v863
    %1114 = vmatpush2.bf16.msra.mxu0 %v862
    %1115 = vmatprep.subr.bf16.mxu0 %v856
    %1116 = vmatpush2.bf16.msra.mxu0 %v855
    %1117 = vmatprep.subr.bf16.mxu0 %v849
    %1118 = vmatpush2.bf16.msra.mxu0 %v848
    %1119 = vmatprep.mubr.bf16.mxu0 %v266
    %1120 = vmatmul.mubr.bf16.gmra.mxu0 %v265
    %v1121 = vpop.f32.mrf.mxu0
    %v1122 = vadd.f32 %v414, %v1121
    %v1123 = vpop.f32.mrf.mxu0
    %v1124 = vadd.f32 %v418, %v1123
    %v1125 = vpop.f32.mrf.mxu0
    %v1126 = vadd.f32 %v414, %v1125
    %v1127 = vpop.f32.mrf.mxu0
    %v1128 = vadd.f32 %v418, %v1127
    %1129 = vmatprep.mubr.bf16.mxu0 %v268
    %1130 = vmatmul.mubr.bf16.gmra.mxu0 %v267
    %v1131 = vpop.f32.mrf.mxu0
    %v1132 = vadd.f32 %v414, %v1131
    %v1133 = vpop.f32.mrf.mxu0
    %v1134 = vadd.f32 %v418, %v1133
    %v1135 = vpop.f32.mrf.mxu0
    %v1136 = vadd.f32 %v414, %v1135
    %v1137 = vpop.f32.mrf.mxu0
    %v1138 = vadd.f32 %v418, %v1137
    %1139 = vmatprep.mubr.bf16.mxu0 %v270
    %1140 = vmatmul.mubr.bf16.gmra.mxu0 %v269
    %v1141 = vpop.f32.mrf.mxu0
    %v1142 = vadd.f32 %v414, %v1141
    %v1143 = vpop.f32.mrf.mxu0
    %v1144 = vadd.f32 %v418, %v1143
    %v1145 = vpop.f32.mrf.mxu0
    %v1146 = vadd.f32 %v414, %v1145
    %v1147 = vpop.f32.mrf.mxu0
    %v1148 = vadd.f32 %v418, %v1147
    %1149 = vmatprep.mubr.bf16.mxu0 %v272
    %1150 = vmatmul.mubr.bf16.gmra.mxu0 %v271
    %v1151 = vpop.f32.mrf.mxu0
    %v1152 = vadd.f32 %v414, %v1151
    %v1153 = vpop.f32.mrf.mxu0
    %v1154 = vadd.f32 %v418, %v1153
    %v1155 = vpop.f32.mrf.mxu0
    %v1156 = vadd.f32 %v414, %v1155
    %v1157 = vpop.f32.mrf.mxu0
    %v1158 = vadd.f32 %v418, %v1157
    %1159 = vdwg.mxu0
    %1160 = vmatprep.subr.bf16.mxu0 %v844
    %1161 = vmatpush1.bf16.msra.mxu0 %v843
    %1162 = vmatprep.subr.bf16.mxu0 %v837
    %1163 = vmatpush1.bf16.msra.mxu0 %v836
    %1164 = vmatprep.subr.bf16.mxu0 %v830
    %1165 = vmatpush1.bf16.msra.mxu0 %v829
    %1166 = vmatprep.subr.bf16.mxu0 %v823
    %1167 = vmatpush1.bf16.msra.mxu0 %v822
    %1168 = vmatprep.subr.bf16.mxu0 %v816
    %1169 = vmatpush1.bf16.msra.mxu0 %v815
    %1170 = vmatprep.subr.bf16.mxu0 %v809
    %1171 = vmatpush1.bf16.msra.mxu0 %v808
    %1172 = vmatprep.subr.bf16.mxu0 %v802
    %1173 = vmatpush1.bf16.msra.mxu0 %v801
    %1174 = vmatprep.subr.bf16.mxu0 %v795
    %1175 = vmatpush1.bf16.msra.mxu0 %v794
    %1176 = vmatprep.subr.bf16.mxu0 %v900
    %1177 = vmatpush2.bf16.msra.mxu0 %v899
    %1178 = vmatprep.subr.bf16.mxu0 %v893
    %1179 = vmatpush2.bf16.msra.mxu0 %v892
    %1180 = vmatprep.subr.bf16.mxu0 %v886
    %1181 = vmatpush2.bf16.msra.mxu0 %v885
    %1182 = vmatprep.subr.bf16.mxu0 %v879
    %1183 = vmatpush2.bf16.msra.mxu0 %v878
    %1184 = vmatprep.subr.bf16.mxu0 %v872
    %1185 = vmatpush2.bf16.msra.mxu0 %v871
    %1186 = vmatprep.subr.bf16.mxu0 %v865
    %1187 = vmatpush2.bf16.msra.mxu0 %v864
    %1188 = vmatprep.subr.bf16.mxu0 %v858
    %1189 = vmatpush2.bf16.msra.mxu0 %v857
    %1190 = vmatprep.subr.bf16.mxu0 %v851
    %1191 = vmatpush2.bf16.msra.mxu0 %v850
    %1192 = vmatprep.mubr.bf16.mxu0 %v266
    %1193 = vmatmul.mubr.bf16.gmra.mxu0 %v265
    %v1194 = vpop.f32.mrf.mxu0
    %v1195 = vadd.f32 %v422, %v1194
    %v1196 = vpop.f32.mrf.mxu0
    %v1197 = vadd.f32 %v426, %v1196
    %v1198 = vpop.f32.mrf.mxu0
    %v1199 = vadd.f32 %v422, %v1198
    %v1200 = vpop.f32.mrf.mxu0
    %v1201 = vadd.f32 %v426, %v1200
    %1202 = vmatprep.mubr.bf16.mxu0 %v268
    %1203 = vmatmul.mubr.bf16.gmra.mxu0 %v267
    %v1204 = vpop.f32.mrf.mxu0
    %v1205 = vadd.f32 %v422, %v1204
    %v1206 = vpop.f32.mrf.mxu0
    %v1207 = vadd.f32 %v426, %v1206
    %v1208 = vpop.f32.mrf.mxu0
    %v1209 = vadd.f32 %v422, %v1208
    %v1210 = vpop.f32.mrf.mxu0
    %v1211 = vadd.f32 %v426, %v1210
    %1212 = vmatprep.mubr.bf16.mxu0 %v270
    %1213 = vmatmul.mubr.bf16.gmra.mxu0 %v269
    %v1214 = vpop.f32.mrf.mxu0
    %v1215 = vadd.f32 %v422, %v1214
    %v1216 = vpop.f32.mrf.mxu0
    %v1217 = vadd.f32 %v426, %v1216
    %v1218 = vpop.f32.mrf.mxu0
    %v1219 = vadd.f32 %v422, %v1218
    %v1220 = vpop.f32.mrf.mxu0
    %v1221 = vadd.f32 %v426, %v1220
    %1222 = vmatprep.mubr.bf16.mxu0 %v272
    %1223 = vmatmul.mubr.bf16.gmra.mxu0 %v271
    %v1224 = vpop.f32.mrf.mxu0
    %v1225 = vadd.f32 %v422, %v1224
    %v1226 = vpop.f32.mrf.mxu0
    %v1227 = vadd.f32 %v426, %v1226
    %v1228 = vpop.f32.mrf.mxu0
    %v1229 = vadd.f32 %v422, %v1228
    %v1230 = vpop.f32.mrf.mxu0
    %v1231 = vadd.f32 %v426, %v1230
    %1232 = vdwg.mxu0
    %1233 = vmatprep.subr.bf16.mxu0 0
    %1234 = vmatpush1.bf16.msra.mxu0 %v845
    %1235 = vmatprep.subr.bf16.mxu0 0
    %1236 = vmatpush1.bf16.msra.mxu0 %v838
    %1237 = vmatprep.subr.bf16.mxu0 0
    %1238 = vmatpush1.bf16.msra.mxu0 %v831
    %1239 = vmatprep.subr.bf16.mxu0 0
    %1240 = vmatpush1.bf16.msra.mxu0 %v824
    %1241 = vmatprep.subr.bf16.mxu0 0
    %1242 = vmatpush1.bf16.msra.mxu0 %v817
    %1243 = vmatprep.subr.bf16.mxu0 0
    %1244 = vmatpush1.bf16.msra.mxu0 %v810
    %1245 = vmatprep.subr.bf16.mxu0 0
    %1246 = vmatpush1.bf16.msra.mxu0 %v803
    %1247 = vmatprep.subr.bf16.mxu0 0
    %1248 = vmatpush1.bf16.msra.mxu0 %v796
    %1249 = vmatprep.subr.bf16.mxu0 0
    %1250 = vmatpush2.bf16.msra.mxu0 %v901
    %1251 = vmatprep.subr.bf16.mxu0 0
    %1252 = vmatpush2.bf16.msra.mxu0 %v894
    %1253 = vmatprep.subr.bf16.mxu0 0
    %1254 = vmatpush2.bf16.msra.mxu0 %v887
    %1255 = vmatprep.subr.bf16.mxu0 0
    %1256 = vmatpush2.bf16.msra.mxu0 %v880
    %1257 = vmatprep.subr.bf16.mxu0 0
    %1258 = vmatpush2.bf16.msra.mxu0 %v873
    %1259 = vmatprep.subr.bf16.mxu0 0
    %1260 = vmatpush2.bf16.msra.mxu0 %v866
    %1261 = vmatprep.subr.bf16.mxu0 0
    %1262 = vmatpush2.bf16.msra.mxu0 %v859
    %1263 = vmatprep.subr.bf16.mxu0 0
    %1264 = vmatpush2.bf16.msra.mxu0 %v852
    %1265 = vmatprep.mubr.bf16.mxu0 %v266
    %1266 = vmatmul.mubr.bf16.gmra.mxu0 %v265
    %v1267 = vpop.f32.mrf.mxu0
    %v1268 = vadd.f32 %v430, %v1267
    %v1269 = vpop.f32.mrf.mxu0
    %v1270 = vpop.f32.mrf.mxu0
    %v1271 = vadd.f32 %v430, %v1270
    %v1272 = vpop.f32.mrf.mxu0
    %1273 = vmatprep.mubr.bf16.mxu0 %v268
    %1274 = vmatmul.mubr.bf16.gmra.mxu0 %v267
    %v1275 = vpop.f32.mrf.mxu0
    %v1276 = vadd.f32 %v430, %v1275
    %v1277 = vpop.f32.mrf.mxu0
    %v1278 = vpop.f32.mrf.mxu0
    %v1279 = vadd.f32 %v430, %v1278
    %v1280 = vpop.f32.mrf.mxu0
    %1281 = vmatprep.mubr.bf16.mxu0 %v270
    %1282 = vmatmul.mubr.bf16.gmra.mxu0 %v269
    %v1283 = vpop.f32.mrf.mxu0
    %v1284 = vadd.f32 %v430, %v1283
    %v1285 = vpop.f32.mrf.mxu0
    %v1286 = vpop.f32.mrf.mxu0
    %v1287 = vadd.f32 %v430, %v1286
    %v1288 = vpop.f32.mrf.mxu0
    %1289 = vmatprep.mubr.bf16.mxu0 %v272
    %1290 = vmatmul.mubr.bf16.gmra.mxu0 %v271
    %v1291 = vpop.f32.mrf.mxu0
    %v1292 = vadd.f32 %v430, %v1291
    %v1293 = vpop.f32.mrf.mxu0
    %v1294 = vpop.f32.mrf.mxu0
    %v1295 = vadd.f32 %v430, %v1294
    %v1296 = vpop.f32.mrf.mxu0
    %1297 = vdwg.mxu0
    %v1298 = vtanh.pop %v1049
    %v1299 = vtanh.pop %v1051
    %v1300 = vtanh.pop %v1122
    %v1301 = vtanh.pop %v1124
    %v1302 = vtanh.pop %v1195
    %v1303 = vtanh.pop %v1197
    %v1304 = vtanh.pop %v1268
    %v1305 = vtanh.pop %v1053
    %v1306 = vtanh.pop %v1055
    %v1307 = vtanh.pop %v1126
    %v1308 = vtanh.pop %v1128
    %v1309 = vtanh.pop %v1199
    %v1310 = vtanh.pop %v1201
    %v1311 = vtanh.pop %v1271
    %v1312 = vtanh.pop %v1059
    %v1313 = vtanh.pop %v1061
    %v1314 = vtanh.pop %v1132
    %v1315 = vtanh.pop %v1134
    %v1316 = vtanh.pop %v1205
    %v1317 = vtanh.pop %v1207
    %v1318 = vtanh.pop %v1276
    %v1319 = vtanh.pop %v1063
    %v1320 = vtanh.pop %v1065
    %v1321 = vtanh.pop %v1136
    %v1322 = vtanh.pop %v1138
    %v1323 = vtanh.pop %v1209
    %v1324 = vtanh.pop %v1211
    %v1325 = vtanh.pop %v1279
    %v1326 = vtanh.pop %v1069
    %v1327 = vtanh.pop %v1071
    %v1328 = vtanh.pop %v1142
    %v1329 = vtanh.pop %v1144
    %v1330 = vtanh.pop %v1215
    %v1331 = vtanh.pop %v1217
    %v1332 = vtanh.pop %v1284
    %v1333 = vtanh.pop %v1073
    %v1334 = vtanh.pop %v1075
    %v1335 = vtanh.pop %v1146
    %v1336 = vtanh.pop %v1148
    %v1337 = vtanh.pop %v1219
    %v1338 = vtanh.pop %v1221
    %v1339 = vtanh.pop %v1287
    %v1340 = vtanh.pop %v1079
    %v1341 = vtanh.pop %v1081
    %v1342 = vtanh.pop %v1152
    %v1343 = vtanh.pop %v1154
    %v1344 = vtanh.pop %v1225
    %v1345 = vtanh.pop %v1227
    %v1346 = vtanh.pop %v1292
    %v1347 = vtanh.pop %v1083
    %v1348 = vtanh.pop %v1085
    %v1349 = vtanh.pop %v1156
    %v1350 = vtanh.pop %v1158
    %v1351 = vtanh.pop %v1229
    %v1352 = vtanh.pop %v1231
    %v1353 = vtanh.pop %v1295
    %v1354 = vpack.c.bf16 %v1305, %v1298
    %v1355 = vpack.c.bf16 %v1306, %v1299
    %v1356 = vpack.c.bf16 %v1307, %v1300
    %v1357 = vpack.c.bf16 %v1308, %v1301
    %v1358 = vpack.c.bf16 %v1309, %v1302
    %v1359 = vpack.c.bf16 %v1310, %v1303
    %v1360 = vpack.c.bf16 %v1311, %v1304
    %v1361 = vpack.c.bf16 %v1319, %v1312
    %v1362 = vpack.c.bf16 %v1320, %v1313
    %v1363 = vpack.c.bf16 %v1321, %v1314
    %v1364 = vpack.c.bf16 %v1322, %v1315
    %v1365 = vpack.c.bf16 %v1323, %v1316
    %v1366 = vpack.c.bf16 %v1324, %v1317
    %v1367 = vpack.c.bf16 %v1325, %v1318
    %v1368 = vpack.c.bf16 %v1333, %v1326
    %v1369 = vpack.c.bf16 %v1334, %v1327
    %v1370 = vpack.c.bf16 %v1335, %v1328
    %v1371 = vpack.c.bf16 %v1336, %v1329
    %v1372 = vpack.c.bf16 %v1337, %v1330
    %v1373 = vpack.c.bf16 %v1338, %v1331
    %v1374 = vpack.c.bf16 %v1339, %v1332
    %v1375 = vpack.c.bf16 %v1347, %v1340
    %v1376 = vpack.c.bf16 %v1348, %v1341
    %v1377 = vpack.c.bf16 %v1349, %v1342
    %v1378 = vpack.c.bf16 %v1350, %v1343
    %v1379 = vpack.c.bf16 %v1351, %v1344
    %v1380 = vpack.c.bf16 %v1352, %v1345
    %v1381 = vpack.c.bf16 %v1353, %v1346
    %v1410 = vunpack.c.l.b16 %v1354
    %v1411 = vunpack.c.l.b16 %v1355
    %v1412 = vunpack.c.l.b16 %v1356
    %v1413 = vunpack.c.l.b16 %v1357
    %v1414 = vunpack.c.l.b16 %v1358
    %v1415 = vunpack.c.l.b16 %v1359
    %v1416 = vunpack.c.l.b16 %v1360
    %v1417 = vunpack.c.h.b16 %v1354
    %v1418 = vunpack.c.h.b16 %v1355
    %v1419 = vunpack.c.h.b16 %v1356
    %v1420 = vunpack.c.h.b16 %v1357
    %v1421 = vunpack.c.h.b16 %v1358
    %v1422 = vunpack.c.h.b16 %v1359
    %v1423 = vunpack.c.h.b16 %v1360
    %v1424 = vunpack.c.l.b16 %v1361
    %v1425 = vunpack.c.l.b16 %v1362
    %v1426 = vunpack.c.l.b16 %v1363
    %v1427 = vunpack.c.l.b16 %v1364
    %v1428 = vunpack.c.l.b16 %v1365
    %v1429 = vunpack.c.l.b16 %v1366
    %v1430 = vunpack.c.l.b16 %v1367
    %v1431 = vunpack.c.h.b16 %v1361
    %v1432 = vunpack.c.h.b16 %v1362
    %v1433 = vunpack.c.h.b16 %v1363
    %v1434 = vunpack.c.h.b16 %v1364
    %v1435 = vunpack.c.h.b16 %v1365
    %v1436 = vunpack.c.h.b16 %v1366
    %v1437 = vunpack.c.h.b16 %v1367
    %v1438 = vunpack.c.l.b16 %v1368
    %v1439 = vunpack.c.l.b16 %v1369
    %v1440 = vunpack.c.l.b16 %v1370
    %v1441 = vunpack.c.l.b16 %v1371
    %v1442 = vunpack.c.l.b16 %v1372
    %v1443 = vunpack.c.l.b16 %v1373
    %v1444 = vunpack.c.l.b16 %v1374
    %v1445 = vunpack.c.h.b16 %v1368
    %v1446 = vunpack.c.h.b16 %v1369
    %v1447 = vunpack.c.h.b16 %v1370
    %v1448 = vunpack.c.h.b16 %v1371
    %v1449 = vunpack.c.h.b16 %v1372
    %v1450 = vunpack.c.h.b16 %v1373
    %v1451 = vunpack.c.h.b16 %v1374
    %v1452 = vunpack.c.l.b16 %v1375
    %v1453 = vunpack.c.l.b16 %v1376
    %v1454 = vunpack.c.l.b16 %v1377
    %v1455 = vunpack.c.l.b16 %v1378
    %v1456 = vunpack.c.l.b16 %v1379
    %v1457 = vunpack.c.l.b16 %v1380
    %v1458 = vunpack.c.l.b16 %v1381
    %v1459 = vunpack.c.h.b16 %v1375
    %v1460 = vunpack.c.h.b16 %v1376
    %v1461 = vunpack.c.h.b16 %v1377
    %v1462 = vunpack.c.h.b16 %v1378
    %v1463 = vunpack.c.h.b16 %v1379
    %v1464 = vunpack.c.h.b16 %v1380
    %v1465 = vunpack.c.h.b16 %v1381
    %v1466 = vpack.c.b16 %v1411, %v1410
    %v1467 = vpack.c.b16 %v1413, %v1412
    %v1468 = vpack.c.b16 %v1415, %v1414
    %v1469 = vpack.c.b16 %v1416, %v1416
    %v1470 = vpack.c.b16 %v1418, %v1417
    %v1471 = vpack.c.b16 %v1420, %v1419
    %v1472 = vpack.c.b16 %v1422, %v1421
    %v1473 = vpack.c.b16 %v1423, %v1423
    %v1474 = vpack.c.b16 %v1425, %v1424
    %v1475 = vpack.c.b16 %v1427, %v1426
    %v1476 = vpack.c.b16 %v1429, %v1428
    %v1477 = vpack.c.b16 %v1430, %v1430
    %v1478 = vpack.c.b16 %v1432, %v1431
    %v1479 = vpack.c.b16 %v1434, %v1433
    %v1480 = vpack.c.b16 %v1436, %v1435
    %v1481 = vpack.c.b16 %v1437, %v1437
    %v1482 = vpack.c.b16 %v1439, %v1438
    %v1483 = vpack.c.b16 %v1441, %v1440
    %v1484 = vpack.c.b16 %v1443, %v1442
    %v1485 = vpack.c.b16 %v1444, %v1444
    %v1486 = vpack.c.b16 %v1446, %v1445
    %v1487 = vpack.c.b16 %v1448, %v1447
    %v1488 = vpack.c.b16 %v1450, %v1449
    %v1489 = vpack.c.b16 %v1451, %v1451
    %v1490 = vpack.c.b16 %v1453, %v1452
    %v1491 = vpack.c.b16 %v1455, %v1454
    %v1492 = vpack.c.b16 %v1457, %v1456
    %v1493 = vpack.c.b16 %v1458, %v1458
    %v1494 = vpack.c.b16 %v1460, %v1459
    %v1495 = vpack.c.b16 %v1462, %v1461
    %v1496 = vpack.c.b16 %v1464, %v1463
    %v1497 = vpack.c.b16 %v1465, %v1465
    %1530 = vst [vmem:[#allocation10] sm:$0xff] %v1466
    %1531 = vst [vmem:[#allocation10 + $0x8] sm:$0xff] %v1467
    %1532 = vst [vmem:[#allocation10 + $0x10] sm:$0xff] %v1468
    %1533 = vst [vmem:[#allocation10 + $0x18] sm:$0xf] %v1469
    %1534 = vst [vmem:[#allocation10 + $0x1c] sm:$0xff] %v1470
    %1535 = vst [vmem:[#allocation10 + $0x24] sm:$0xff] %v1471
    %1536 = vst [vmem:[#allocation10 + $0x2c] sm:$0xff] %v1472
    %1537 = vst [vmem:[#allocation10 + $0x34] sm:$0xf] %v1473
    %1538 = vst [vmem:[#allocation10 + $0x38] sm:$0xff] %v1474
    %1539 = vst [vmem:[#allocation10 + $0x40] sm:$0xff] %v1475
    %1540 = vst [vmem:[#allocation10 + $0x48] sm:$0xff] %v1476
    %1541 = vst [vmem:[#allocation10 + $0x50] sm:$0xf] %v1477
    %1542 = vst [vmem:[#allocation10 + $0x54] sm:$0xff] %v1478
    %1543 = vst [vmem:[#allocation10 + $0x5c] sm:$0xff] %v1479
    %1544 = vst [vmem:[#allocation10 + $0x64] sm:$0xff] %v1480
    %1545 = vst [vmem:[#allocation10 + $0x6c] sm:$0xf] %v1481
    %1546 = vst [vmem:[#allocation10 + $0x70] sm:$0xff] %v1482
    %1547 = vst [vmem:[#allocation10 + $0x78] sm:$0xff] %v1483
    %1548 = vst [vmem:[#allocation10 + $0x80] sm:$0xff] %v1484
    %1549 = vst [vmem:[#allocation10 + $0x88] sm:$0xf] %v1485
    %1550 = vst [vmem:[#allocation10 + $0x8c] sm:$0xff] %v1486
    %1551 = vst [vmem:[#allocation10 + $0x94] sm:$0xff] %v1487
    %1552 = vst [vmem:[#allocation10 + $0x9c] sm:$0xff] %v1488
    %1553 = vst [vmem:[#allocation10 + $0xa4] sm:$0xf] %v1489
    %1554 = vst [vmem:[#allocation10 + $0xa8] sm:$0xff] %v1490
    %1555 = vst [vmem:[#allocation10 + $0xb0] sm:$0xff] %v1491
    %1556 = vst [vmem:[#allocation10 + $0xb8] sm:$0xff] %v1492
    %1557 = vst [vmem:[#allocation10 + $0xc0] sm:$0xf] %v1493
    %1558 = vst [vmem:[#allocation10 + $0xc4] sm:$0xff] %v1494
    %1559 = vst [vmem:[#allocation10 + $0xcc] sm:$0xff] %v1495
    %1560 = vst [vmem:[#allocation10 + $0xd4] sm:$0xff] %v1496
    %1561 = vst [vmem:[#allocation10 + $0xdc] sm:$0xf] %v1497
    // Predicated region
    $region38: #{tpu_custom_call.1} parent=1 // pred_check
      _
    $region39: #{tpu_custom_call.1} parent=1 // pred_check_branch
      %1563 = sbr.rel (0) target = $region41
    $region40: #{tpu_custom_call.1} parent=1 // pred_region
      %s1565 = ssub.s32 3584, 3584
      %1566 = vsyncadd [#allocation4], %s1565
      %s1567 = sshll.u32 [#allocation10], 4
      %s1568 = int_to_ptr.vmem [resolvable:$true] %s1567
      %1573 = dma.vmem_to_hbm [thread:$0]  %s1568, 3584, %s5, [#allocation4], 448, 448, 28
    $region41: #{tpu_custom_call.1} parent=1 // pred_fallthru
      _
    // Predicated region
    $region42: #{tpu_custom_call.1} parent=1 // pred_check
      _
    $region43: #{tpu_custom_call.1} parent=1 // pred_check_branch
      %1575 = sbr.rel (0) target = $region45
    $region44: #{tpu_custom_call.1} parent=1 // pred_region
      %1576 = dma.done [#allocation4], 3584
    $region45: #{tpu_custom_call.1} parent=1 // pred_fallthru
      _
    %1577 = vsyncpa [#allocation3], 1
    %1578 = vsyncpa [#allocation6], 1
    %1579 = vsyncpa [#allocation9], 1
    %1580 = vsyncpa [#allocation4], 1

</llo_original>
